<compile_context>
chip_gen: v6e
topology: v6e:2x2x1
jax: 0.10.0
libtpu: 0.0.40
codegen_flags: <defaults>
</compile_context>

<pallas_src>
import jax
import jax.numpy as jnp
from jax import lax
from jax.experimental import pallas as pl
from jax.experimental.pallas import tpu as pltpu


def _round_up(x, m):
    return ((x + m - 1) // m) * m


def _vmem_capacity_bytes():
    """Per-TensorCore VMEM capacity; conservative fallback if the query fails."""
    try:
        return int(pltpu.get_tpu_info().vmem_capacity_bytes)
    except Exception:
        return 64 << 20  # v7x per-TC VMEM; safe lower bound for v5e/v6e too.


def _choose_hidden_block(h_pad, max_len, itemsize, budget):
    """Largest multiple of 128 that divides h_pad whose (double-buffered)
    table column block fits within half the working VMEM budget."""
    m = h_pad // 128
    best = 128
    for d in range(1, m + 1):
        if m % d:
            continue
        hc = 128 * d
        if 2 * max_len * hc * itemsize <= budget // 2:
            best = hc
    return best


def _onehot_gather_kernel(idx_ref, table_ref, out_ref):
    """One (rows, hc) output tile = one_hot(idx) @ table_block (MXU gather).

    idx_ref:   VMEM (rows, 1) int32  -- clamped row indices for this tile.
    table_ref: VMEM (max_len, hc)    -- resident column block of the table.
    out_ref:   VMEM (rows, hc)       -- gathered output tile.
    """
    rows = out_ref.shape[0]
    max_len = table_ref.shape[0]
    positions = lax.broadcasted_iota(jnp.int32, (rows, max_len), 1)
    # Keep the one-hot in the table's native dtype; f32 accumulation keeps the
    # selection exact (exactly one 1.0 per row).
    one_hot = (positions == idx_ref[...]).astype(table_ref.dtype)
    out_ref[...] = jnp.dot(
        one_hot, table_ref[...], preferred_element_type=jnp.float32
    ).astype(out_ref.dtype)


def learned_positional_encoding(timestep, pe_table, *, rows_per_step=None,
                                force_pallas=False):
    """Pallas equivalent of LearnedPositionalEncoding.forward(timestep)."""
    B, T = timestep.shape
    max_len, H = pe_table.shape
    itemsize = pe_table.dtype.itemsize

    # Clamp indices so every gather stays in-bounds (nn.Embedding's contract is
    # "caller passes valid indices"; we make the kernel safe regardless).
    flat_idx = jnp.clip(timestep.reshape(-1).astype(jnp.int32), 0, max_len - 1)
    N = flat_idx.shape[0]

    # Tiny problems: launch + pipeline overhead plus the table DMA dominates,
    # so let XLA's fused gather handle anything under ~2 MiB of output.
    if not force_pallas and N * H * itemsize < (2 << 20):
        return jnp.take(pe_table, flat_idx, axis=0).reshape(B, T, H)

    # --- Generation-aware VMEM budgeting -----------------------------------
    vmem_cap = _vmem_capacity_bytes()
    budget = vmem_cap // 2  # leave headroom for compiler scratch / pipelining

    # Lane-dense output: pad hidden dim to a multiple of 128.
    h_pad = _round_up(H, 128)
    hc = _choose_hidden_block(h_pad, max_len, itemsize, budget)
    num_h_blocks = h_pad // hc

    table_block_bytes = 2 * max_len * hc * itemsize            # double-buffered
    per_row_bytes = 2 * (hc * itemsize + 128 * 4)               # out + idx tiles
    avail = max(budget - table_block_bytes, 8 * per_row_bytes)

    if rows_per_step is None:
        rows_per_step = min(512, avail // per_row_bytes)
        # v7x megacore: keep >= 2 row tiles when there is enough work so the
        # "parallel" axis can actually be split across both TensorCores.
        if N >= 16:
            rows_per_step = min(rows_per_step, _round_up((N + 1) // 2, 8))
    rows_per_step = max(8, (int(rows_per_step) // 8) * 8)

    n_pad = _round_up(N, rows_per_step)
    if n_pad != N:
        flat_idx = jnp.pad(flat_idx, (0, n_pad - N))  # pad rows gather row 0
    num_row_tiles = n_pad // rows_per_step
    idx_2d = flat_idx.reshape(n_pad, 1)

    table_padded = pe_table
    if h_pad != H:
        table_padded = jnp.pad(pe_table, ((0, 0), (0, h_pad - H)))

    params = {"dimension_semantics": ("arbitrary", "parallel")}
    needed_vmem = (table_block_bytes
                   + 2 * rows_per_step * hc * itemsize
                   + 2 * rows_per_step * 128 * 4)
    if needed_vmem > (16 << 20):
        # Never request more than the chip physically has (v7x: 64 MiB/TC).
        cap = (vmem_cap * 7) // 8
        params["vmem_limit_bytes"] = int(min(needed_vmem + (8 << 20), cap))

    out_flat = pl.pallas_call(
        _onehot_gather_kernel,
        out_shape=jax.ShapeDtypeStruct((n_pad, h_pad), pe_table.dtype),
        grid_spec=pltpu.PrefetchScalarGridSpec(
            num_scalar_prefetch=0,
            # Column blocks outer ("arbitrary"): each table column block is
            # DMA'd once and reused across all row tiles of the inner
            # "parallel" axis.
            grid=(num_h_blocks, num_row_tiles),
            in_specs=[
                pl.BlockSpec((rows_per_step, 1), lambda h, i: (i, 0)),
                pl.BlockSpec((max_len, hc), lambda h, i: (0, h)),
            ],
            out_specs=pl.BlockSpec((rows_per_step, hc), lambda h, i: (i, h)),
        ),
        compiler_params=pltpu.CompilerParams(**params),
    )(idx_2d, table_padded)

    out_flat = out_flat[:N, :H]
    return out_flat.reshape(B, T, H)


if __name__ == "__main__":
    max_len = 16
    hidden_size = 32
    B, T = 2, 8

    key = jax.random.PRNGKey(0)
    k_table, k_idx = jax.random.split(key)

    # nn.Embedding(max_len, hidden_size).weight ~ N(0, 1), deterministic here.
    pe_table = jax.random.normal(k_table, (max_len, hidden_size), dtype=jnp.float32)
    timestep = jax.random.randint(k_idx, (B, T), 0, max_len, dtype=jnp.int32)

    out = learned_positional_encoding(timestep, pe_table, force_pallas=True)
    out = jax.block_until_ready(out)

    # Reference: plain gather, identical semantics to pe(timestep) in PyTorch.
    ref = pe_table[timestep]

    assert out.shape == (B, T, hidden_size), out.shape
    assert out.dtype == jnp.float32, out.dtype
    assert jnp.allclose(out, ref), "mismatch vs reference embedding lookup"

    print("KERNEL_OK")
</pallas_src>

<mosaic_0001>
module attributes {stable_mosaic.version = 11 : i64} {
  func.func @_onehot_gather_kernel(%arg0: i32, %arg1: i32, %arg2: memref<8x1xi32, #tpu.memory_space<vmem>>, %arg3: memref<16x128xf32, #tpu.memory_space<vmem>>, %arg4: memref<8x128xf32, #tpu.memory_space<vmem>>) attributes {dimension_semantics = [#tpu.dimension_semantics<arbitrary>, #tpu.dimension_semantics<parallel>], iteration_bounds = array<i64: 1, 2>, scalar_prefetch = 0 : i64, scratch_operands = 0 : i64, tpu.core_type = #tpu.core_type<tc>, window_params = [{transform_indices = @transform_0, window_bounds = array<i64: 8, 1>}, {transform_indices = @transform_1, window_bounds = array<i64: 16, 128>}, {transform_indices = @transform_2, window_bounds = array<i64: 8, 128>}]} {
    %0 = tpu.iota {dimensions = array<i32: 1>} : vector<8x16xi32>
    %c0 = arith.constant 0 : index
    %c0_0 = arith.constant 0 : index
    %1 = vector.load %arg2[%c0, %c0_0] : memref<8x1xi32, #tpu.memory_space<vmem>>, vector<8x1xi32>
    %2 = vector.broadcast %1 : vector<8x1xi32> to vector<8x16xi32>
    %3 = arith.cmpi eq, %0, %2 : vector<8x16xi32>
    %4 = arith.extui %3 : vector<8x16xi1> to vector<8x16xi32>
    %5 = arith.sitofp %4 : vector<8x16xi32> to vector<8x16xf32>
    %c0_1 = arith.constant 0 : index
    %c0_2 = arith.constant 0 : index
    %6 = vector.load %arg3[%c0_1, %c0_2] : memref<16x128xf32, #tpu.memory_space<vmem>>, vector<16x128xf32>
    %cst = arith.constant dense<0.000000e+00> : vector<8x128xf32>
    %7 = tpu.matmul %5, %6, %cst {dimension_numbers = #tpu.dot_dimension_numbers<[1], [0], [0], [1], [0, 0, 1, 1], [], []>} : vector<8x16xf32>, vector<16x128xf32>, vector<8x128xf32> -> vector<8x128xf32>
    %c0_3 = arith.constant 0 : index
    %c0_4 = arith.constant 0 : index
    %8 = vector.load %arg4[%c0_3, %c0_4] : memref<8x128xf32, #tpu.memory_space<vmem>>, vector<8x128xf32>
    tpu.vector_store %arg4[%c0_3, %c0_4], %7 {strides = array<i32>} : memref<8x128xf32, #tpu.memory_space<vmem>>, vector<8x128xf32>,
    return
  }
  func.func @transform_0(%arg0: i32, %arg1: i32) -> (i32, i32) {
    %c0_i32 = arith.constant 0 : i32
    %c0_i32_0 = arith.constant 0 : i32
    return %arg1, %c0_i32 : i32, i32
  }
  func.func @transform_1(%arg0: i32, %arg1: i32) -> (i32, i32) {
    %c0_i32 = arith.constant 0 : i32
    %c0_i32_0 = arith.constant 0 : i32
    return %c0_i32, %arg0 : i32, i32
  }
  func.func @transform_2(%arg0: i32, %arg1: i32) -> (i32, i32) {
    %c0_i32 = arith.constant 0 : i32
    return %arg1, %arg0 : i32, i32
  }
}

</mosaic_0001>

<llo_original>
// kernel: tpu_custom_call.1
$region0: #{tpu_custom_call.1}
  #allocation0 [shape = 'u32[]', space=smem, size = 0x4, offset = 0x4, fixed_abs, tag = 'smem constant byte address 0x4 - core index']
  #allocation1 [shape = 'u32[144,128]{1,0:T(1,128)}', space=vmem, size = 0x12000, scoped, tag = 'internal scratch']
  %s0 = inlined_call_operand.vmem [shape: s32[16,1], index: 0, kind: input, shape index: {}]
  %s1 = inlined_call_operand.vmem [shape: f32[16,128], index: 1, kind: input, shape index: {}]
  %s2 = inlined_call_operand.hbm [shape: f32[16,128], index: 2, kind: output, shape index: {}]
  %s3 = sld [smem:[#allocation0]]
  $region41: #{tpu_custom_call.1} parent=0
    _
  %s5 = ssub.s32 1, %s3
  %s6 = scalar_select 0, %s5, %s3
  $region1: #{tpu_custom_call.1} parent=0
    #allocation2 [shape = 'u8[8192]{0}', space=vmem, size = 0x2000, scoped, tag = 'output window, operand 0']
    #allocation3 [shape = 's32[2]{0}', space=sflag, size = 0x8, scoped, tag = 'scoped memory for tpu_custom_call.1']
    %7 = vsyncpa [#allocation3], 0
    %s8 = scalar_lea.sflag [#allocation3], 1
    %9 = vsyncpa %s8, 0
    loop: start=0, step=1, limit=4
    $region2: #{tpu_custom_call.1} parent=1 // loop_pre_header
      _
    $region3: #{tpu_custom_call.1} parent=1 // loop_header
      %s11 = sphi 0, %s15
      %p12 = scmp.ge.s32.totalorder %s11, 4
      %s18 = sphi 0, %s30
      %s19 = sphi 0, %s26
      %s20 = sphi 0, %s18
      %s21 = sphi 0, %s19
      %s22 = sphi 0, %s20
      %s23 = sphi 0, %s21
      %s33 = sphi 0, %s35
      %s36 = sphi 0, %s33
      %s37 = sphi 0, %s36
      %s53 = sphi 0, %s37
      %s59 = sphi 0, %s61
      %s62 = sphi 0, %s59
      %s63 = sphi 0, %s62
      %s79 = sphi 0, %s63
      %s87 = sphi 0, %s89
      %s90 = sphi 0, %s87
      %s91 = sphi 0, %s90
      %s107 = sphi 0, %s91
    $region4: #{tpu_custom_call.1} parent=1 // loop_header_branch
      %14 = sbr.rel (%p12) target = $region8
    $region5: #{tpu_custom_call.1} parent=1 // loop_body
      %s16 = ssub.s32 %s11, 1
      %s17 = ssub.s32 %s11, 2
      %s24 = sadd.s32 1, %s19
      %p25 = scmp.ge.s32.totalorder %s24, 2
      %s26 = scalar_select %p25, 0, %s24
      %s27 = sadd.s32 1, %s18
      %s28 = scalar_select %p25, %s27, %s18
      %p29 = scmp.ge.s32.totalorder %s28, 1
      %s30 = scalar_select %p29, 0, %s28
      %s31 = ssub.s32 %s19, %s26
      %p32 = scmp.eq.s32.totalorder %s31, 0
      %s34 = sadd.s32 %s33, 1
      %s35 = scalar_select %p32, %s33, %s34
      %p38 = pneg %p32
      %p39 = scmp.eq.s32.totalorder %s11, 1
      %p40 = por %p38, %p39
      %p41 = scmp.ne.s32.totalorder %s33, %s36
      %p42 = scmp.eq.s32.totalorder %s11, 0
      %p43 = por %p41, %p42
      %p44 = scmp.ne.s32.totalorder %s33, %s36
      %p45 = scmp.eq.s32.totalorder %s16, 1
      %p46 = por %p44, %p45
      %p47 = scmp.ne.s32.totalorder %s36, %s37
      %p48 = scmp.eq.s32.totalorder %s16, 0
      %p49 = por %p47, %p48
      %p50 = scmp.ne.s32.totalorder %s36, %s37
      %p51 = scmp.eq.s32.totalorder %s17, 1
      %p52 = por %p50, %p51
      %p54 = scmp.ne.s32.totalorder %s37, %s53
      %p55 = scmp.eq.s32.totalorder %s17, 0
      %p56 = por %p54, %p55
      %s57 = ssub.s32 %s18, %s30
      %p58 = scmp.eq.s32.totalorder %s57, 0
      %s60 = sadd.s32 %s59, 1
      %s61 = scalar_select %p58, %s59, %s60
      %p64 = pneg %p58
      %p65 = scmp.eq.s32.totalorder %s11, 1
      %p66 = por %p64, %p65
      %p67 = scmp.ne.s32.totalorder %s59, %s62
      %p68 = scmp.eq.s32.totalorder %s11, 0
      %p69 = por %p67, %p68
      %p70 = scmp.ne.s32.totalorder %s59, %s62
      %p71 = scmp.eq.s32.totalorder %s16, 1
      %p72 = por %p70, %p71
      %p73 = scmp.ne.s32.totalorder %s62, %s63
      %p74 = scmp.eq.s32.totalorder %s16, 0
      %p75 = por %p73, %p74
      %p76 = scmp.ne.s32.totalorder %s62, %s63
      %p77 = scmp.eq.s32.totalorder %s17, 1
      %p78 = por %p76, %p77
      %p80 = scmp.ne.s32.totalorder %s63, %s79
      %p81 = scmp.eq.s32.totalorder %s17, 0
      %p82 = por %p80, %p81
      %s83 = ssub.s32 %s19, %s26
      %s84 = ssub.s32 %s18, %s30
      %s85 = sor.u32 %s83, %s84
      %p86 = scmp.eq.s32.totalorder %s85, 0
      %s88 = sadd.s32 %s87, 1
      %s89 = scalar_select %p86, %s87, %s88
      %p92 = pneg %p86
      %p93 = scmp.eq.s32.totalorder %s11, 1
      %p94 = por %p92, %p93
      %p95 = scmp.ne.s32.totalorder %s87, %s90
      %p96 = scmp.eq.s32.totalorder %s11, 0
      %p97 = por %p95, %p96
      %p98 = scmp.ne.s32.totalorder %s87, %s90
      %p99 = scmp.eq.s32.totalorder %s16, 1
      %p100 = por %p98, %p99
      %p101 = scmp.ne.s32.totalorder %s90, %s91
      %p102 = scmp.eq.s32.totalorder %s16, 0
      %p103 = por %p101, %p102
      %p104 = scmp.ne.s32.totalorder %s90, %s91
      %p105 = scmp.eq.s32.totalorder %s17, 1
      %p106 = por %p104, %p105
      %p108 = scmp.ne.s32.totalorder %s91, %s107
      %p109 = scmp.eq.s32.totalorder %s17, 0
      %p110 = por %p108, %p109
      %p111 = scmp.le.s32.totalorder 1, %s11
      %p112 = scmp.lt.s32.totalorder %s11, 3
      %p113 = pnand %p111, %p112
      %p114 = pneg %p113
      // Predicated region
      $region9: #{tpu_custom_call.1} parent=5 // pred_check
        _
      $region10: #{tpu_custom_call.1} parent=5 // pred_check_branch
        %116 = sbr.rel (%p113) target = $region12
      $region11: #{tpu_custom_call.1} parent=5 // pred_region
        %s117 = ssub.s32 %s11, 1
        // Predicated region
        $region13: #{tpu_custom_call.1} parent=11 // pred_check
          %p118 = pneg %p75
        $region14: #{tpu_custom_call.1} parent=11 // pred_check_branch
          %120 = sbr.rel (%p118) target = $region16
        $region15: #{tpu_custom_call.1} parent=11 // pred_region
          %p121 = scmp.lt.s32.totalorder %s20, 0
          %s122 = scalar_select %p121, %s20, 0
          %s123 = smul.addr %s122, 8
          %s124 = scalar_lea.vmem %s1, %s123
        $region16: #{tpu_custom_call.1} parent=11 // pred_fallthru
          _
      $region12: #{tpu_custom_call.1} parent=5 // pred_fallthru
        _
      %p125 = scmp.lt.s32.totalorder %s11, 2
      // Predicated region
      $region17: #{tpu_custom_call.1} parent=5 // pred_check
        %p126 = pneg %p125
      $region18: #{tpu_custom_call.1} parent=5 // pred_check_branch
        %128 = sbr.rel (%p126) target = $region20
      $region19: #{tpu_custom_call.1} parent=5 // pred_region
        // Predicated region
        $region21: #{tpu_custom_call.1} parent=19 // pred_check
          %p129 = pneg %p43
        $region22: #{tpu_custom_call.1} parent=19 // pred_check_branch
          %131 = sbr.rel (%p129) target = $region24
        $region23: #{tpu_custom_call.1} parent=19 // pred_region
          %p132 = scmp.lt.s32.totalorder %s19, 1
          %s133 = scalar_select %p132, %s19, 1
          %s134 = smul.addr %s133, 8
          %s135 = scalar_lea.vmem %s0, %s134
        $region24: #{tpu_custom_call.1} parent=19 // pred_fallthru
          _
      $region20: #{tpu_custom_call.1} parent=5 // pred_fallthru
        _
      %p136 = scmp.le.s32.totalorder 1, %s11
      %p137 = scmp.lt.s32.totalorder %s11, 3
      %p138 = pnand %p136, %p137
      %p139 = pneg %p138
      // Predicated region
      $region25: #{tpu_custom_call.1} parent=5 // pred_check
        _
      $region26: #{tpu_custom_call.1} parent=5 // pred_check_branch
        %141 = sbr.rel (%p138) target = $region28
      $region27: #{tpu_custom_call.1} parent=5 // pred_region
        %s142 = ssub.s32 %s11, 1
        %p143 = scmp.lt.s32.totalorder %s21, 1
        %s144 = scalar_select %p143, %s21, 1
        %s145 = smul.addr %s144, 8
        %s146 = scalar_lea.vmem %s0, %s145
        %p147 = pneg %p49
        %p148 = pneg %p46
        %p149 = scmp.lt.s32.totalorder %s20, 0
        %s150 = scalar_select %p149, %s20, 0
        %s151 = smul.addr %s150, 8
        %s152 = scalar_lea.vmem %s1, %s151
        %p153 = pneg %p75
        %p154 = pneg %p72
        %p155 = pneg %p103
        %p156 = pneg %p100
        %s157 = sand.u32 %s90, 1
        %s158 = scalar_lea.sflag [#allocation3], %s157
        %s159 = sand.u32 %s90, 1
        %s160 = smul.addr %s159, 8
        %s161 = scalar_lea.vmem [#allocation2], %s160
        %p162 = scmp.lt.s32.totalorder %s21, 1
        %s163 = scalar_select %p162, %s21, 1
        %s164 = smul.addr %s163, 8
        %s165 = scalar_lea.vmem %s0, %s164
        %p166 = scmp.lt.s32.totalorder %s20, 0
        %s167 = scalar_select %p166, %s20, 0
        %s168 = smul.addr %s167, 8
        %s169 = scalar_lea.vmem %s1, %s168
        %v170 = vlaneseq
        %v171 = vand.u32 %v170, 127
        %v172 = vld [vmem:[%s165] sm:$0xff]
        %173 = vset.pattern.permute.xlu0 0
        %174 = vperm.xlu0 %173, %v172
        %v175 = vpop.permute.xlu0 %174
        %vm176 = vcmp.eq.s32.totalorder %v171, %v175
        %v177 = vsel %vm176, 1, 0
        %v178 = vcvt.s32.f32 %v177
        %v179 = vld [vmem:[%s169] sm:$0xff]
        %v180 = vld [vmem:[%s169 + $0x8] sm:$0xff]
        %vm181 = vcmask 130048
        %v183 = vsel %vm181, %v178, 0
        %185 = vmatprep.subr.mxu0 0.0
        %186 = vmatpush1.msra.mxu0 0.0
        %187 = vmatprep.subr.mxu0 0.0
        %188 = vmatpush1.msra.mxu0 0.0
        %189 = vmatprep.subr.mxu0 0.0
        %190 = vmatpush1.msra.mxu0 0.0
        %191 = vmatprep.subr.mxu0 0.0
        %192 = vmatpush1.msra.mxu0 0.0
        %193 = vmatprep.subr.mxu0 0.0
        %194 = vmatpush1.msra.mxu0 0.0
        %195 = vmatprep.subr.mxu0 0.0
        %196 = vmatpush1.msra.mxu0 0.0
        %197 = vmatprep.subr.mxu0 0.0
        %198 = vmatpush1.msra.mxu0 0.0
        %199 = vmatprep.subr.mxu0 0.0
        %200 = vmatpush1.msra.mxu0 0.0
        %201 = vmatprep.subr.mxu0 0.0
        %202 = vmatpush1.msra.mxu0 0.0
        %203 = vmatprep.subr.mxu0 0.0
        %204 = vmatpush1.msra.mxu0 0.0
        %205 = vmatprep.subr.mxu0 0.0
        %206 = vmatpush1.msra.mxu0 0.0
        %207 = vmatprep.subr.mxu0 0.0
        %208 = vmatpush1.msra.mxu0 0.0
        %209 = vmatprep.subr.mxu0 0.0
        %210 = vmatpush1.msra.mxu0 0.0
        %211 = vmatprep.subr.mxu0 0.0
        %212 = vmatpush1.msra.mxu0 0.0
        %213 = vmatprep.subr.mxu0 0.0
        %214 = vmatpush1.msra.mxu0 %v180
        %215 = vmatprep.subr.mxu0 0.0
        %216 = vmatpush1.msra.mxu0 %v179
        %217 = vmatprep.subr.mxu0 0.0
        %218 = vmatpush2.msra.mxu0 0.0
        %219 = vmatprep.subr.mxu0 0.0
        %220 = vmatpush2.msra.mxu0 0.0
        %221 = vmatprep.subr.mxu0 0.0
        %222 = vmatpush2.msra.mxu0 0.0
        %223 = vmatprep.subr.mxu0 0.0
        %224 = vmatpush2.msra.mxu0 0.0
        %225 = vmatprep.subr.mxu0 0.0
        %226 = vmatpush2.msra.mxu0 0.0
        %227 = vmatprep.subr.mxu0 0.0
        %228 = vmatpush2.msra.mxu0 0.0
        %229 = vmatprep.subr.mxu0 0.0
        %230 = vmatpush2.msra.mxu0 0.0
        %231 = vmatprep.subr.mxu0 0.0
        %232 = vmatpush2.msra.mxu0 0.0
        %233 = vmatprep.subr.mxu0 0.0
        %234 = vmatpush2.msra.mxu0 0.0
        %235 = vmatprep.subr.mxu0 0.0
        %236 = vmatpush2.msra.mxu0 0.0
        %237 = vmatprep.subr.mxu0 0.0
        %238 = vmatpush2.msra.mxu0 0.0
        %239 = vmatprep.subr.mxu0 0.0
        %240 = vmatpush2.msra.mxu0 0.0
        %241 = vmatprep.subr.mxu0 0.0
        %242 = vmatpush2.msra.mxu0 0.0
        %243 = vmatprep.subr.mxu0 0.0
        %244 = vmatpush2.msra.mxu0 0.0
        %245 = vmatprep.subr.mxu0 0.0
        %246 = vmatpush2.msra.mxu0 0.0
        %247 = vmatprep.subr.mxu0 0.0
        %248 = vmatpush2.msra.mxu0 0.0
        %249 = vmatprep.mubr.f32.mxu0 0.0
        %250 = vmatmul.mubr.f32.gmra.mxu0 %v183
        %v251 = vpop.f32.mrf.mxu0
        %v252 = vadd.f32 0.0, %v251
        %v253 = vpop.f32.mrf.mxu0
        %254 = vdwg.mxu0
        %255 = vst [vmem:[%s161] sm:$0xff] %v252
        %s256 = sand.u32 %s90, 1
        %s257 = scalar_lea.sflag [#allocation3], %s256
        %s258 = sand.u32 %s90, 1
        %s259 = smul.addr %s258, 8
        %s260 = scalar_lea.vmem [#allocation2], %s259
        // Predicated region
        $region29: #{tpu_custom_call.1} parent=27 // pred_check
          %p261 = pneg %p100
        $region30: #{tpu_custom_call.1} parent=27 // pred_check_branch
          %263 = sbr.rel (%p261) target = $region32
        $region31: #{tpu_custom_call.1} parent=27 // pred_region
          %s265 = ssub.s32 128, 128
          %266 = vsyncadd %s257, %s265
          %s267 = sadd.s32 %s20, %s21
          %s268 = smul.addr %s267, 128
          %s269 = scalar_lea.hbm %s2, %s268
          %s271 = sshll.u32 %s260, 4
          %s272 = int_to_ptr.vmem [resolvable:$true] %s271
          %274 = dma.vmem_to_hbm [thread:$0]  %s272, 128, %s269, %s257
        $region32: #{tpu_custom_call.1} parent=27 // pred_fallthru
          _
      $region28: #{tpu_custom_call.1} parent=5 // pred_fallthru
        _
      %p275 = scmp.le.s32.totalorder 2, %s11
      // Predicated region
      $region33: #{tpu_custom_call.1} parent=5 // pred_check
        %p276 = pneg %p275
      $region34: #{tpu_custom_call.1} parent=5 // pred_check_branch
        %278 = sbr.rel (%p276) target = $region36
      $region35: #{tpu_custom_call.1} parent=5 // pred_region
        %s279 = ssub.s32 %s11, 2
        // Predicated region
        $region37: #{tpu_custom_call.1} parent=35 // pred_check
          %p280 = pneg %p106
        $region38: #{tpu_custom_call.1} parent=35 // pred_check_branch
          %282 = sbr.rel (%p280) target = $region40
        $region39: #{tpu_custom_call.1} parent=35 // pred_region
          %s283 = sand.u32 %s91, 1
          %s284 = scalar_lea.sflag [#allocation3], %s283
          %s285 = sand.u32 %s91, 1
          %s286 = smul.addr %s285, 8
          %s287 = scalar_lea.vmem [#allocation2], %s286
          %288 = dma.done %s284, 128
        $region40: #{tpu_custom_call.1} parent=35 // pred_fallthru
          _
      $region36: #{tpu_custom_call.1} parent=5 // pred_fallthru
        _
    $region6: #{tpu_custom_call.1} parent=1 // loop_footer
      %s15 = sadd.s32 1, %s11
    $region7: #{tpu_custom_call.1} parent=1 // loop_footer_branch
      %10 = sbr.rel target = $region3
    $region8: #{tpu_custom_call.1} parent=1 // loop_exit
      _
    %289 = vsyncpa [#allocation3], 1
    %s290 = scalar_lea.sflag [#allocation3], 1
    %291 = vsyncpa %s290, 1

</llo_original>
